<compile_context>
chip_gen: v7x
topology: tpu7x:2x2x1
jax: 0.10.0
libtpu: 0.0.40
codegen_flags: <defaults>
</compile_context>

<pallas_src>
import functools
import math

import jax
import jax.numpy as jnp
from jax.experimental import pallas as pl
from jax.experimental.pallas import tpu as pltpu


# ---------------------------------------------------------------------------
# Per-generation VMEM budget (v5e/v6e: 128 MiB physical -> ~96 MiB; v7x: 64 -> 48 MiB)
# ---------------------------------------------------------------------------
def _default_vmem_limit():
    try:
        cap = pltpu.get_tpu_info().vmem_capacity_bytes
    except Exception:
        cap = 64 * 1024 * 1024          # conservative fallback (v7x-sized)
    return int(min(cap * 3 // 4, 100 * 1024 * 1024))


_VMEM_LIMIT = _default_vmem_limit()


def _tile(dim, target, align):
    """Largest divisor of `dim` <= target that is a multiple of `align`; falls back to
    the full extent (block == array dim is always a legal BlockSpec)."""
    if dim <= target:
        return dim
    t = (target // align) * align
    while t >= align:
        if dim % t == 0:
            return t
        t -= align
    return dim


# ---------------------------------------------------------------------------
# Pallas kernel 1: linear layer  y = x @ W_t + b   (W_t already [in, out], bf16)
# ---------------------------------------------------------------------------
def _linear_kernel(x_ref, w_ref, b_ref, o_ref):
    x = x_ref[...].astype(jnp.bfloat16)          # bf16 MXU operand, f32 accumulate
    acc = jnp.dot(x, w_ref[...], preferred_element_type=jnp.float32)
    o_ref[...] = (acc + b_ref[0]).astype(o_ref.dtype)


def _linear(x2, w_t, b2, *, out_dtype=jnp.float32, block_m=512, block_n=512):
    """x2: (M, K), w_t: (K, N) bf16, b2: (1, N) f32  ->  (M, N) out_dtype."""
    M, K = x2.shape
    Kw, N = w_t.shape
    assert K == Kw and b2.shape == (1, N)
    bm = _tile(M, block_m, 8)
    bn = _tile(N, block_n, 128)
    assert M % bm == 0 and N % bn == 0
    return pl.pallas_call(
        _linear_kernel,
        grid=(M // bm, N // bn),
        in_specs=[
            pl.BlockSpec((bm, K), lambda i, j: (i, 0)),   # activations stream over M
            pl.BlockSpec((K, bn), lambda i, j: (0, j)),   # weight: N-tiled, K resident
            pl.BlockSpec((1, bn), lambda i, j: (0, j)),   # bias: N-tiled
        ],
        out_specs=pl.BlockSpec((bm, bn), lambda i, j: (i, j)),
        out_shape=jax.ShapeDtypeStruct((M, N), out_dtype),
        compiler_params=pltpu.CompilerParams(
            dimension_semantics=("parallel", "parallel"),
            vmem_limit_bytes=_VMEM_LIMIT),
    )(x2, w_t, b2)


# ---------------------------------------------------------------------------
# Pallas kernel 2: attention core, heads batched per block, query-tiled grid
# ---------------------------------------------------------------------------
def _attn_core_kernel(q_ref, k_ref, v_ref, att_ref, attw_ref):
    # q is already scaled by 1/sqrt(hd) (folded into the fused QKV weight host-side).
    q = q_ref[...]                                       # (hb, tq, hd) bf16
    k = k_ref[...]                                       # (hb, S,  hd) bf16
    v = v_ref[...]                                       # (hb, S,  hd) bf16

    # Heads batched through single dot_generals on the MXU; bf16 in, f32 accumulate.
    s = jnp.einsum('hqd,hkd->hqk', q, k,
                   preferred_element_type=jnp.float32)   # (hb, tq, S) f32

    # Numerically-stable softmax over keys, all in f32; exact reciprocal (attw contract).
    m = jnp.max(s, axis=-1, keepdims=True)
    e = jnp.exp(s - m)
    p = e * pl.reciprocal(jnp.sum(e, axis=-1, keepdims=True), approx=False)

    # Single f32 store of this block's probabilities (lane-dense when S is a
    # multiple of 128).  dropout(p) == p (eval-mode semantics).
    attw_ref[...] = p

    att = jnp.einsum('hqk,hkd->hqd', p.astype(jnp.bfloat16), v,
                     preferred_element_type=jnp.float32)
    att_ref[...] = att.astype(att_ref.dtype)


def _attn_core(qh, kh, vh, *, num_heads, block_q=128):
    """qh/kh/vh: (B*H, S, hd) bf16 -> (attended (B*H,S,hd) bf16, attw (B*H,S,S) f32)."""
    BH, S, hd = qh.shape
    tq = _tile(S, block_q, 8)                 # query tiling bounds intermediates
    hb = num_heads
    # Guarantee >=2 grid steps so both v7x TensorCores get work even at B=1 / tiny S.
    if (BH // hb) * (S // tq) < 2 and hb % 2 == 0:
        hb //= 2
    assert BH % hb == 0 and S % tq == 0

    att, attw = pl.pallas_call(
        _attn_core_kernel,
        grid=(BH // hb, S // tq),
        in_specs=[
            pl.BlockSpec((hb, tq, hd), lambda h, q: (h, q, 0)),   # Q: query-tiled
            pl.BlockSpec((hb, S, hd), lambda h, q: (h, 0, 0)),    # K: full S, head-keyed
            pl.BlockSpec((hb, S, hd), lambda h, q: (h, 0, 0)),    # V: full S, head-keyed
        ],
        out_specs=[
            pl.BlockSpec((hb, tq, hd), lambda h, q: (h, q, 0)),
            pl.BlockSpec((hb, tq, S), lambda h, q: (h, q, 0)),
        ],
        out_shape=[
            jax.ShapeDtypeStruct((BH, S, hd), jnp.bfloat16),
            jax.ShapeDtypeStruct((BH, S, S), jnp.float32),
        ],
        compiler_params=pltpu.CompilerParams(
            dimension_semantics=("parallel", "parallel"),
            vmem_limit_bytes=_VMEM_LIMIT),
    )(qh, kh, vh)
    return att, attw


# ---------------------------------------------------------------------------
# One-time (non-jitted) parameter preparation — run at parameter-load time.
# ---------------------------------------------------------------------------
def prepare_params(params, num_heads):
    """Fuse + pre-transpose QKV weights, fold the 1/sqrt(hd) scale into the Q columns,
    cast matmul weights to bf16.  PyTorch Linear layout on input: W is [out, in]."""
    wq, bq, wk, bk, wv, bv, wo, bo = params
    D = wq.shape[0]
    hd = D // num_heads
    scale = 1.0 / math.sqrt(hd)
    wqkv_t = jnp.concatenate([wq * scale, wk, wv], axis=0).T           # (D, 3D)
    bqkv = jnp.concatenate([bq * scale, bk, bv], axis=0).reshape(1, 3 * D)
    return (wqkv_t.astype(jnp.bfloat16),
            bqkv.astype(jnp.float32),
            wo.T.astype(jnp.bfloat16),                                  # (D, D)
            bo.reshape(1, D).astype(jnp.float32))


# ---------------------------------------------------------------------------
# Wrapper: full TemporalAttention forward (expects prepared params)
# ---------------------------------------------------------------------------
def temporal_attention(x, wqkv_t, bqkv, wo_t, bo2, *, num_heads):
    """x: (B, S, D) f32.  Returns (output (B,S,D) f32, attention_weights (B,H,S,S) f32)."""
    B, S, D = x.shape
    assert D % num_heads == 0
    hd = D // num_heads

    # 1) fused QKV projection (batch folded into M); bf16 output halves Q/K/V HBM traffic.
    qkv = _linear(x.reshape(B * S, D), wqkv_t, bqkv, out_dtype=jnp.bfloat16)  # (B*S, 3D)
    q, k, v = jnp.split(qkv, 3, axis=-1)

    # Head split as wrapper-side layout plumbing (XLA), not in-kernel relayouts.
    def to_heads(t):
        return (t.reshape(B, S, num_heads, hd)
                 .transpose(0, 2, 1, 3)
                 .reshape(B * num_heads, S, hd))
    qh, kh, vh = to_heads(q), to_heads(k), to_heads(v)

    # 2) attention core (heads batched per block, query-tiled grid).
    att_h, attw_h = _attn_core(qh, kh, vh, num_heads=num_heads)

    attw = attw_h.reshape(B, num_heads, S, S)
    attended = (att_h.reshape(B, num_heads, S, hd)
                     .transpose(0, 2, 1, 3)
                     .reshape(B * S, D))

    # 3) output projection (same Pallas linear kernel), f32 output.
    out = _linear(attended, wo_t, bo2, out_dtype=jnp.float32).reshape(B, S, D)
    return out, attw


# ---------------------------------------------------------------------------
# Pure-JAX f32 reference of the PyTorch forward (eval mode, mask=None)
# ---------------------------------------------------------------------------
def _reference(x, params, num_heads):
    B, S, D = x.shape
    hd = D // num_heads
    wq, bq, wk, bk, wv, bv, wo, bo = params

    def proj(w, b):
        y = jnp.einsum('bsd,ed->bse', x, w) + b
        return y.reshape(B, S, num_heads, hd).transpose(0, 2, 1, 3)   # (B,H,S,hd)

    Q, K, V = proj(wq, bq), proj(wk, bk), proj(wv, bv)
    scores = jnp.einsum('bhqd,bhkd->bhqk', Q, K) / math.sqrt(hd)
    attw = jax.nn.softmax(scores, axis=-1)
    attended = jnp.einsum('bhqk,bhkd->bhqd', attw, V)
    attended = attended.transpose(0, 2, 1, 3).reshape(B, S, D)
    out = jnp.einsum('bsd,ed->bse', attended, wo) + bo
    return out, attw


if __name__ == "__main__":
    B, S, D, H = 2, 8, 32, 4

    key = jax.random.PRNGKey(0)
    keys = jax.random.split(key, 9)
    x = jax.random.normal(keys[0], (B, S, D), dtype=jnp.float32)

    # deterministic parameter init, PyTorch-Linear-like uniform(-1/sqrt(D), 1/sqrt(D))
    bound = 1.0 / math.sqrt(D)
    def uni(k, shape):
        return jax.random.uniform(k, shape, jnp.float32, -bound, bound)

    params = (
        uni(keys[1], (D, D)), uni(keys[2], (D,)),   # query
        uni(keys[3], (D, D)), uni(keys[4], (D,)),   # key
        uni(keys[5], (D, D)), uni(keys[6], (D,)),   # value
        uni(keys[7], (D, D)), uni(keys[8], (D,)),   # output_linear
    )

    # One-time weight fusion at parameter-load time (outside jit).
    prepared = prepare_params(params, H)

    fn = jax.jit(functools.partial(temporal_attention, num_heads=H))
    out, attw = fn(x, *prepared)
    jax.block_until_ready(out)
    jax.block_until_ready(attw)

    out_ref, attw_ref = _reference(x, params, H)
    assert out.shape == (B, S, D) and attw.shape == (B, H, S, S)
    # bf16 MXU operands with f32 accumulation -> loosened tolerances vs the f32 reference.
    assert jnp.allclose(out, out_ref, atol=2.5e-2, rtol=2.5e-2)
    assert jnp.allclose(attw, attw_ref, atol=1.5e-2, rtol=1.5e-2)

    print("KERNEL_OK")
</pallas_src>

<mosaic_0001>
module attributes {stable_mosaic.version = 11 : i64} {
  func.func @_linear_kernel(%arg0: i32, %arg1: i32, %arg2: memref<16x32xf32, #tpu.memory_space<vmem>>, %arg3: memref<32x96xbf16, #tpu.memory_space<vmem>>, %arg4: memref<1x96xf32, #tpu.memory_space<vmem>>, %arg5: memref<16x96xbf16, #tpu.memory_space<vmem>>) attributes {dimension_semantics = [#tpu.dimension_semantics<parallel>, #tpu.dimension_semantics<parallel>], iteration_bounds = array<i64: 1, 1>, scalar_prefetch = 0 : i64, scratch_operands = 0 : i64, tpu.core_type = #tpu.core_type<tc>, window_params = [{transform_indices = @transform_0, window_bounds = array<i64: 16, 32>}, {transform_indices = @transform_1, window_bounds = array<i64: 32, 96>}, {transform_indices = @transform_2, window_bounds = array<i64: 1, 96>}, {transform_indices = @transform_3, window_bounds = array<i64: 16, 96>}]} {
    %c0 = arith.constant 0 : index
    %c0_0 = arith.constant 0 : index
    %0 = vector.load %arg2[%c0, %c0_0] : memref<16x32xf32, #tpu.memory_space<vmem>>, vector<16x32xf32>
    %1 = arith.truncf %0 : vector<16x32xf32> to vector<16x32xbf16>
    %c0_1 = arith.constant 0 : index
    %c0_2 = arith.constant 0 : index
    %2 = vector.load %arg3[%c0_1, %c0_2] : memref<32x96xbf16, #tpu.memory_space<vmem>>, vector<32x96xbf16>
    %cst = arith.constant dense<0.000000e+00> : vector<16x96xf32>
    %3 = tpu.matmul %1, %2, %cst {dimension_numbers = #tpu.dot_dimension_numbers<[1], [0], [0], [1], [0, 0, 1, 1], [], []>} : vector<16x32xbf16>, vector<32x96xbf16>, vector<16x96xf32> -> vector<16x96xf32>
    %c0_3 = arith.constant 0 : index
    %c0_4 = arith.constant 0 : index
    %4 = vector.load %arg4[%c0_3, %c0_4] : memref<1x96xf32, #tpu.memory_space<vmem>>, vector<1x96xf32>
    %5 = vector.shape_cast %4 : vector<1x96xf32> to vector<96xf32>
    %6 = vector.shape_cast %5 : vector<96xf32> to vector<1x96xf32>
    %7 = vector.broadcast %6 : vector<1x96xf32> to vector<16x96xf32>
    %8 = arith.addf %3, %7 : vector<16x96xf32>
    %9 = arith.truncf %8 : vector<16x96xf32> to vector<16x96xbf16>
    %c0_5 = arith.constant 0 : index
    %c0_6 = arith.constant 0 : index
    %10 = vector.load %arg5[%c0_5, %c0_6] : memref<16x96xbf16, #tpu.memory_space<vmem>>, vector<16x96xbf16>
    tpu.vector_store %arg5[%c0_5, %c0_6], %9 {strides = array<i32>} : memref<16x96xbf16, #tpu.memory_space<vmem>>, vector<16x96xbf16>,
    return
  }
  func.func @transform_0(%arg0: i32, %arg1: i32) -> (i32, i32) {
    %c0_i32 = arith.constant 0 : i32
    %c0_i32_0 = arith.constant 0 : i32
    return %arg0, %c0_i32 : i32, i32
  }
  func.func @transform_1(%arg0: i32, %arg1: i32) -> (i32, i32) {
    %c0_i32 = arith.constant 0 : i32
    %c0_i32_0 = arith.constant 0 : i32
    return %c0_i32, %arg1 : i32, i32
  }
  func.func @transform_2(%arg0: i32, %arg1: i32) -> (i32, i32) {
    %c0_i32 = arith.constant 0 : i32
    %c0_i32_0 = arith.constant 0 : i32
    return %c0_i32, %arg1 : i32, i32
  }
  func.func @transform_3(%arg0: i32, %arg1: i32) -> (i32, i32) {
    %c0_i32 = arith.constant 0 : i32
    return %arg0, %arg1 : i32, i32
  }
}

module attributes {stable_mosaic.version = 11 : i64} {
  func.func @_attn_core_kernel(%arg0: i32, %arg1: i32, %arg2: memref<4x8x8xbf16, #tpu.memory_space<vmem>>, %arg3: memref<4x8x8xbf16, #tpu.memory_space<vmem>>, %arg4: memref<4x8x8xbf16, #tpu.memory_space<vmem>>, %arg5: memref<4x8x8xbf16, #tpu.memory_space<vmem>>, %arg6: memref<4x8x8xf32, #tpu.memory_space<vmem>>) attributes {dimension_semantics = [#tpu.dimension_semantics<parallel>, #tpu.dimension_semantics<parallel>], iteration_bounds = array<i64: 2, 1>, scalar_prefetch = 0 : i64, scratch_operands = 0 : i64, tpu.core_type = #tpu.core_type<tc>, window_params = [{transform_indices = @transform_0, window_bounds = array<i64: 4, 8, 8>}, {transform_indices = @transform_1, window_bounds = array<i64: 4, 8, 8>}, {transform_indices = @transform_2, window_bounds = array<i64: 4, 8, 8>}, {transform_indices = @transform_3, window_bounds = array<i64: 4, 8, 8>}, {transform_indices = @transform_4, window_bounds = array<i64: 4, 8, 8>}]} {
    %c0 = arith.constant 0 : index
    %c0_0 = arith.constant 0 : index
    %c0_1 = arith.constant 0 : index
    %0 = vector.load %arg2[%c0, %c0_0, %c0_1] : memref<4x8x8xbf16, #tpu.memory_space<vmem>>, vector<4x8x8xbf16>
    %c0_2 = arith.constant 0 : index
    %c0_3 = arith.constant 0 : index
    %c0_4 = arith.constant 0 : index
    %1 = vector.load %arg3[%c0_2, %c0_3, %c0_4] : memref<4x8x8xbf16, #tpu.memory_space<vmem>>, vector<4x8x8xbf16>
    %c0_5 = arith.constant 0 : index
    %c0_6 = arith.constant 0 : index
    %c0_7 = arith.constant 0 : index
    %2 = vector.load %arg4[%c0_5, %c0_6, %c0_7] : memref<4x8x8xbf16, #tpu.memory_space<vmem>>, vector<4x8x8xbf16>
    "tpu.trace_start"() <{level = 10 : i32, message = "hqd,hkd->hqk"}> : () -> ()
    %cst = arith.constant dense<0.000000e+00> : vector<4x8x8xf32>
    %3 = tpu.matmul %0, %1, %cst {dimension_numbers = #tpu.dot_dimension_numbers<[2], [2], [1], [1], [0, 0, 0, 1, 1, 1], [0], [0]>} : vector<4x8x8xbf16>, vector<4x8x8xbf16>, vector<4x8x8xf32> -> vector<4x8x8xf32>
    "tpu.trace_stop"() : () -> ()
    %cst_8 = arith.constant dense<0xFF800000> : vector<4x8xf32>
    %4 = vector.multi_reduction <maximumf>, %3, %cst_8 [2] : vector<4x8x8xf32> to vector<4x8xf32>
    %5 = vector.shape_cast %4 : vector<4x8xf32> to vector<4x8x1xf32>
    %6 = vector.broadcast %5 : vector<4x8x1xf32> to vector<4x8x8xf32>
    %7 = arith.subf %3, %6 : vector<4x8x8xf32>
    %8 = math.exp %7 : vector<4x8x8xf32>
    %cst_9 = arith.constant dense<0.000000e+00> : vector<4x8xf32>
    %9 = vector.multi_reduction <add>, %8, %cst_9 [2] : vector<4x8x8xf32> to vector<4x8xf32>
    %10 = vector.shape_cast %9 : vector<4x8xf32> to vector<4x8x1xf32>
    %11 = tpu.reciprocal %10 : vector<4x8x1xf32> -> vector<4x8x1xf32>
    %12 = vector.broadcast %11 : vector<4x8x1xf32> to vector<4x8x8xf32>
    %13 = arith.mulf %8, %12 : vector<4x8x8xf32>
    %c0_10 = arith.constant 0 : index
    %c0_11 = arith.constant 0 : index
    %c0_12 = arith.constant 0 : index
    %14 = vector.load %arg6[%c0_10, %c0_11, %c0_12] : memref<4x8x8xf32, #tpu.memory_space<vmem>>, vector<4x8x8xf32>
    tpu.vector_store %arg6[%c0_10, %c0_11, %c0_12], %13 {strides = array<i32>} : memref<4x8x8xf32, #tpu.memory_space<vmem>>, vector<4x8x8xf32>,
    %15 = arith.truncf %13 : vector<4x8x8xf32> to vector<4x8x8xbf16>
    "tpu.trace_start"() <{level = 10 : i32, message = "hqk,hkd->hqd"}> : () -> ()
    %cst_13 = arith.constant dense<0.000000e+00> : vector<4x8x8xf32>
    %16 = tpu.matmul %15, %2, %cst_13 {dimension_numbers = #tpu.dot_dimension_numbers<[2], [1], [1], [2], [0, 0, 0, 1, 1, 2], [0], [0]>} : vector<4x8x8xbf16>, vector<4x8x8xbf16>, vector<4x8x8xf32> -> vector<4x8x8xf32>
    "tpu.trace_stop"() : () -> ()
    %17 = arith.truncf %16 : vector<4x8x8xf32> to vector<4x8x8xbf16>
    %c0_14 = arith.constant 0 : index
    %c0_15 = arith.constant 0 : index
    %c0_16 = arith.constant 0 : index
    %18 = vector.load %arg5[%c0_14, %c0_15, %c0_16] : memref<4x8x8xbf16, #tpu.memory_space<vmem>>, vector<4x8x8xbf16>
    tpu.vector_store %arg5[%c0_14, %c0_15, %c0_16], %17 {strides = array<i32>} : memref<4x8x8xbf16, #tpu.memory_space<vmem>>, vector<4x8x8xbf16>,
    return
  }
  func.func @transform_0(%arg0: i32, %arg1: i32) -> (i32, i32, i32) {
    %c0_i32 = arith.constant 0 : i32
    %c0_i32_0 = arith.constant 0 : i32
    return %arg0, %arg1, %c0_i32 : i32, i32, i32
  }
  func.func @transform_1(%arg0: i32, %arg1: i32) -> (i32, i32, i32) {
    %c0_i32 = arith.constant 0 : i32
    %c0_i32_0 = arith.constant 0 : i32
    %c0_i32_1 = arith.constant 0 : i32
    return %arg0, %c0_i32, %c0_i32_0 : i32, i32, i32
  }
  func.func @transform_2(%arg0: i32, %arg1: i32) -> (i32, i32, i32) {
    %c0_i32 = arith.constant 0 : i32
    %c0_i32_0 = arith.constant 0 : i32
    %c0_i32_1 = arith.constant 0 : i32
    return %arg0, %c0_i32, %c0_i32_0 : i32, i32, i32
  }
  func.func @transform_3(%arg0: i32, %arg1: i32) -> (i32, i32, i32) {
    %c0_i32 = arith.constant 0 : i32
    %c0_i32_0 = arith.constant 0 : i32
    return %arg0, %arg1, %c0_i32 : i32, i32, i32
  }
  func.func @transform_4(%arg0: i32, %arg1: i32) -> (i32, i32, i32) {
    %c0_i32 = arith.constant 0 : i32
    %c0_i32_0 = arith.constant 0 : i32
    return %arg0, %arg1, %c0_i32 : i32, i32, i32
  }
}

module attributes {stable_mosaic.version = 11 : i64} {
  func.func @_linear_kernel(%arg0: i32, %arg1: i32, %arg2: memref<16x32xbf16, #tpu.memory_space<vmem>>, %arg3: memref<32x32xbf16, #tpu.memory_space<vmem>>, %arg4: memref<1x32xf32, #tpu.memory_space<vmem>>, %arg5: memref<16x32xf32, #tpu.memory_space<vmem>>) attributes {dimension_semantics = [#tpu.dimension_semantics<parallel>, #tpu.dimension_semantics<parallel>], iteration_bounds = array<i64: 1, 1>, scalar_prefetch = 0 : i64, scratch_operands = 0 : i64, tpu.core_type = #tpu.core_type<tc>, window_params = [{transform_indices = @transform_0, window_bounds = array<i64: 16, 32>}, {transform_indices = @transform_1, window_bounds = array<i64: 32, 32>}, {transform_indices = @transform_2, window_bounds = array<i64: 1, 32>}, {transform_indices = @transform_3, window_bounds = array<i64: 16, 32>}]} {
    %c0 = arith.constant 0 : index
    %c0_0 = arith.constant 0 : index
    %0 = vector.load %arg2[%c0, %c0_0] : memref<16x32xbf16, #tpu.memory_space<vmem>>, vector<16x32xbf16>
    %c0_1 = arith.constant 0 : index
    %c0_2 = arith.constant 0 : index
    %1 = vector.load %arg3[%c0_1, %c0_2] : memref<32x32xbf16, #tpu.memory_space<vmem>>, vector<32x32xbf16>
    %cst = arith.constant dense<0.000000e+00> : vector<16x32xf32>
    %2 = tpu.matmul %0, %1, %cst {dimension_numbers = #tpu.dot_dimension_numbers<[1], [0], [0], [1], [0, 0, 1, 1], [], []>} : vector<16x32xbf16>, vector<32x32xbf16>, vector<16x32xf32> -> vector<16x32xf32>
    %c0_3 = arith.constant 0 : index
    %c0_4 = arith.constant 0 : index
    %3 = vector.load %arg4[%c0_3, %c0_4] : memref<1x32xf32, #tpu.memory_space<vmem>>, vector<1x32xf32>
    %4 = vector.shape_cast %3 : vector<1x32xf32> to vector<32xf32>
    %5 = vector.shape_cast %4 : vector<32xf32> to vector<1x32xf32>
    %6 = vector.broadcast %5 : vector<1x32xf32> to vector<16x32xf32>
    %7 = arith.addf %2, %6 : vector<16x32xf32>
    %c0_5 = arith.constant 0 : index
    %c0_6 = arith.constant 0 : index
    %8 = vector.load %arg5[%c0_5, %c0_6] : memref<16x32xf32, #tpu.memory_space<vmem>>, vector<16x32xf32>
    tpu.vector_store %arg5[%c0_5, %c0_6], %7 {strides = array<i32>} : memref<16x32xf32, #tpu.memory_space<vmem>>, vector<16x32xf32>,
    return
  }
  func.func @transform_0(%arg0: i32, %arg1: i32) -> (i32, i32) {
    %c0_i32 = arith.constant 0 : i32
    %c0_i32_0 = arith.constant 0 : i32
    return %arg0, %c0_i32 : i32, i32
  }
  func.func @transform_1(%arg0: i32, %arg1: i32) -> (i32, i32) {
    %c0_i32 = arith.constant 0 : i32
    %c0_i32_0 = arith.constant 0 : i32
    return %c0_i32, %arg1 : i32, i32
  }
  func.func @transform_2(%arg0: i32, %arg1: i32) -> (i32, i32) {
    %c0_i32 = arith.constant 0 : i32
    %c0_i32_0 = arith.constant 0 : i32
    return %c0_i32, %arg1 : i32, i32
  }
  func.func @transform_3(%arg0: i32, %arg1: i32) -> (i32, i32) {
    %c0_i32 = arith.constant 0 : i32
    return %arg0, %arg1 : i32, i32
  }
}

</mosaic_0001>

<llo_original>
// kernel: temporal_attention.5
$region0: #{temporal_attention.5}
  #allocation0 [shape = 'u32[]', space=smem, size = 0x4, offset = 0x4, fixed_abs, tag = 'smem constant byte address 0x4 - core index']
  #allocation1 [shape = 'u32[144,128]{1,0:T(1,128)}', space=vmem, size = 0x12000, scoped, tag = 'internal scratch']
  %s0 = inlined_call_operand.vmem [shape: bf16[16,32], index: 0, kind: input, shape index: {}]
  %s1 = inlined_call_operand.vmem [shape: bf16[32,32], index: 1, kind: input, shape index: {}]
  %s2 = inlined_call_operand.vmem [shape: f32[1,32], index: 2, kind: input, shape index: {}]
  %s3 = inlined_call_operand.hbm [shape: f32[16,32], index: 3, kind: output, shape index: {}]
  %s4 = sld [smem:[#allocation0]]
  $region22: #{temporal_attention.5} parent=0
    _
  %s6 = ssub.s32 1, %s4
  %s7 = scalar_select 0, %s6, %s4
  $region1: #{temporal_attention.5} parent=0
    #allocation2 [shape = 'u8[8192]{0}', space=vmem, size = 0x2000, scoped, tag = 'output window, operand 0, single buffered']
    #allocation3 [shape = 's32[1]{0}', space=sflag, size = 0x4, scoped, tag = 'scoped memory for temporal_attention.5']
    %8 = vsyncpa [#allocation3], 0
    // Predicated region
    $region2: #{temporal_attention.5} parent=1 // pred_check
      _
    $region3: #{temporal_attention.5} parent=1 // pred_check_branch
      %10 = sbr.rel (0) target = $region5
    $region4: #{temporal_attention.5} parent=1 // pred_region
      _
    $region5: #{temporal_attention.5} parent=1 // pred_fallthru
      _
    // Predicated region
    $region6: #{temporal_attention.5} parent=1 // pred_check
      _
    $region7: #{temporal_attention.5} parent=1 // pred_check_branch
      %12 = sbr.rel (0) target = $region9
    $region8: #{temporal_attention.5} parent=1 // pred_region
      _
    $region9: #{temporal_attention.5} parent=1 // pred_fallthru
      _
    // Predicated region
    $region10: #{temporal_attention.5} parent=1 // pred_check
      _
    $region11: #{temporal_attention.5} parent=1 // pred_check_branch
      %14 = sbr.rel (0) target = $region13
    $region12: #{temporal_attention.5} parent=1 // pred_region
      _
    $region13: #{temporal_attention.5} parent=1 // pred_fallthru
      _
    %v16 = vld [vmem:[%s0] sm:$0xf]
    %v17 = vld [vmem:[%s0 + $0x4] sm:$0xf]
    %v18 = vld [vmem:[%s1] sm:$0xf]
    %v19 = vld [vmem:[%s1 + $0x4] sm:$0xf]
    %v20 = vld [vmem:[%s1 + $0x8] sm:$0xf]
    %v21 = vld [vmem:[%s1 + $0xc] sm:$0xf]
    %v22 = vld [vmem:[%s2] sm:$0x1]
    %v24 = vlaneseq
    %v25 = vshrl.u32 %v24, 7
    %v26 = vsub.s32 0, %v25
    %v27 = vrot.slane %v22, %v26
    %v31 = vunpack.c.l.b16 %v16
    %v32 = vunpack.c.l.b16 %v17
    %v33 = vpack.c.b16 %v32, %v31
    %v38 = vunpack.c.l.b16 %v18
    %v39 = vunpack.c.l.b16 %v19
    %v40 = vunpack.c.l.b16 %v20
    %v41 = vunpack.c.l.b16 %v21
    %v42 = vpack.c.b16 %v39, %v38
    %v43 = vpack.c.b16 %v41, %v40
    %vm46 = vcmask 261120
    %v48 = vsel %vm46, %v33, 0
    %50 = vmatprep.subr.bf16.mxu0 0
    %51 = vmatpush1.bf16.msra.mxu0 %v42
    %52 = vmatprep.subr.bf16.mxu0 0
    %53 = vmatpush1.bf16.msra.mxu0 %v43
    %54 = vmatprep.subr.bf16.mxu0 0
    %55 = vmatpush1.bf16.msra.mxu0 0
    %56 = vmatprep.subr.bf16.mxu0 0
    %57 = vmatpush1.bf16.msra.mxu0 0
    %58 = vmatprep.subr.bf16.mxu0 0
    %59 = vmatpush1.bf16.msra.mxu0 0
    %60 = vmatprep.subr.bf16.mxu0 0
    %61 = vmatpush1.bf16.msra.mxu0 0
    %62 = vmatprep.subr.bf16.mxu0 0
    %63 = vmatpush1.bf16.msra.mxu0 0
    %64 = vmatprep.subr.bf16.mxu0 0
    %65 = vmatpush1.bf16.msra.mxu0 0
    %66 = vmatprep.subr.bf16.mxu0 0
    %67 = vmatpush1.bf16.msra.mxu0 0
    %68 = vmatprep.subr.bf16.mxu0 0
    %69 = vmatpush1.bf16.msra.mxu0 0
    %70 = vmatprep.subr.bf16.mxu0 0
    %71 = vmatpush1.bf16.msra.mxu0 0
    %72 = vmatprep.subr.bf16.mxu0 0
    %73 = vmatpush1.bf16.msra.mxu0 0
    %74 = vmatprep.subr.bf16.mxu0 0
    %75 = vmatpush1.bf16.msra.mxu0 0
    %76 = vmatprep.subr.bf16.mxu0 0
    %77 = vmatpush1.bf16.msra.mxu0 0
    %78 = vmatprep.subr.bf16.mxu0 0
    %79 = vmatpush1.bf16.msra.mxu0 0
    %80 = vmatprep.subr.bf16.mxu0 0
    %81 = vmatpush1.bf16.msra.mxu0 0
    %82 = vmatprep.mubr.bf16.mxu0 0
    %83 = vmatmul.mubr.bf16.gmra.mrb[0].mxu0 %v48
    %v84 = vpop.f32.mrb[0].mxu0
    %v85 = vadd.f32 %v27, %v84
    %v86 = vpop.f32.mrb[0].mxu0
    %v87 = vpop.f32.mrb[0].mxu0
    %v88 = vadd.f32 %v27, %v87
    %v89 = vpop.f32.mrb[0].mxu0
    %90 = vdwg.mxu0
    %91 = vst.msk [vmem:[#allocation2] sm:$0xff] %vm46, %v85
    %92 = vst.msk [vmem:[#allocation2 + $0x8] sm:$0xff] %vm46, %v88
    // Predicated region
    $region14: #{temporal_attention.5} parent=1 // pred_check
      _
    $region15: #{temporal_attention.5} parent=1 // pred_check_branch
      %94 = sbr.rel (0) target = $region17
    $region16: #{temporal_attention.5} parent=1 // pred_region
      %s96 = ssub.s32 256, 256
      %97 = vsyncadd [#allocation3], %s96
      %s98 = sshll.u32 [#allocation2], 4
      %s99 = int_to_ptr.vmem [resolvable:$true] %s98
      %104 = dma.vmem_to_hbm [thread:$0]  %s99, 256, %s3, [#allocation3], 128, 128, 8
    $region17: #{temporal_attention.5} parent=1 // pred_fallthru
      _
    // Predicated region
    $region18: #{temporal_attention.5} parent=1 // pred_check
      _
    $region19: #{temporal_attention.5} parent=1 // pred_check_branch
      %106 = sbr.rel (0) target = $region21
    $region20: #{temporal_attention.5} parent=1 // pred_region
      %107 = dma.done [#allocation3], 256
    $region21: #{temporal_attention.5} parent=1 // pred_fallthru
      _
    %108 = vsyncpa [#allocation3], 1

// kernel: temporal_attention.3
$region0: #{temporal_attention.3}
  #allocation0 [shape = 'u32[]', space=smem, size = 0x4, offset = 0x4, fixed_abs, tag = 'smem constant byte address 0x4 - core index']
  #allocation1 [shape = 'u32[144,128]{1,0:T(1,128)}', space=vmem, size = 0x12000, scoped, tag = 'internal scratch']
  %s0 = inlined_call_operand.hbm [shape: f32[16,32], index: 0, kind: input, shape index: {}]
  %s1 = inlined_call_operand.hbm [shape: bf16[32,96], index: 1, kind: input, shape index: {}]
  %s2 = inlined_call_operand.vmem [shape: f32[1,96], index: 2, kind: input, shape index: {}]
  %s3 = inlined_call_operand.vmem [shape: bf16[16,96], index: 3, kind: output, shape index: {}]
  %s4 = sld [smem:[#allocation0]]
  $region30: #{temporal_attention.3} parent=0
    _
  %s6 = ssub.s32 1, %s4
  %s7 = scalar_select 0, %s6, %s4
  $region1: #{temporal_attention.3} parent=0
    #allocation2 [shape = 'u8[8192]{0}', space=vmem, size = 0x2000, scoped, tag = 'input window, operand 0, single buffered']
    #allocation3 [shape = 's32[1]{0}', space=sflag, size = 0x4, scoped, tag = 'scoped memory for temporal_attention.3']
    #allocation4 [shape = 'u8[8192]{0}', space=vmem, size = 0x2000, scoped, tag = 'input window, operand 1, single buffered']
    #allocation5 [shape = 's32[1]{0}', space=sflag, size = 0x4, scoped, tag = 'scoped memory for temporal_attention.3']
    %8 = vsyncpa [#allocation3], 0
    %9 = vsyncpa [#allocation5], 0
    // Predicated region
    $region2: #{temporal_attention.3} parent=1 // pred_check
      _
    $region3: #{temporal_attention.3} parent=1 // pred_check_branch
      %11 = sbr.rel (0) target = $region5
    $region4: #{temporal_attention.3} parent=1 // pred_region
      %s13 = ssub.s32 256, 256
      %14 = vsyncadd [#allocation3], %s13
      %s15 = sshll.u32 [#allocation2], 4
      %s16 = int_to_ptr.vmem [resolvable:$true] %s15
      %21 = dma.hbm_to_vmem [thread:$0]  %s0, 256, %s16, [#allocation3], 128, 128, 8
    $region5: #{temporal_attention.3} parent=1 // pred_fallthru
      _
    // Predicated region
    $region6: #{temporal_attention.3} parent=1 // pred_check
      _
    $region7: #{temporal_attention.3} parent=1 // pred_check_branch
      %23 = sbr.rel (0) target = $region9
    $region8: #{temporal_attention.3} parent=1 // pred_region
      %s25 = ssub.s32 256, 256
      %26 = vsyncadd [#allocation5], %s25
      %s27 = sshll.u32 [#allocation4], 4
      %s28 = int_to_ptr.vmem [resolvable:$true] %s27
      %33 = dma.hbm_to_vmem [thread:$0]  %s1, 256, %s28, [#allocation5], 64, 64, 4
    $region9: #{temporal_attention.3} parent=1 // pred_fallthru
      _
    // Predicated region
    $region10: #{temporal_attention.3} parent=1 // pred_check
      _
    $region11: #{temporal_attention.3} parent=1 // pred_check_branch
      %35 = sbr.rel (0) target = $region13
    $region12: #{temporal_attention.3} parent=1 // pred_region
      _
    $region13: #{temporal_attention.3} parent=1 // pred_fallthru
      _
    // Predicated region
    $region14: #{temporal_attention.3} parent=1 // pred_check
      _
    $region15: #{temporal_attention.3} parent=1 // pred_check_branch
      %37 = sbr.rel (0) target = $region17
    $region16: #{temporal_attention.3} parent=1 // pred_region
      %38 = dma.done [#allocation3], 256
    $region17: #{temporal_attention.3} parent=1 // pred_fallthru
      _
    // Predicated region
    $region18: #{temporal_attention.3} parent=1 // pred_check
      _
    $region19: #{temporal_attention.3} parent=1 // pred_check_branch
      %40 = sbr.rel (0) target = $region21
    $region20: #{temporal_attention.3} parent=1 // pred_region
      %41 = dma.done [#allocation5], 256
    $region21: #{temporal_attention.3} parent=1 // pred_fallthru
      _
    %v43 = vld [vmem:[#allocation2] sm:$0xff]
    %v44 = vld [vmem:[#allocation2 + $0x8] sm:$0xff]
    %v45 = vpack.c.bf16 %v44, %v43
    %v46 = vld [vmem:[#allocation4] sm:$0xf]
    %v47 = vld [vmem:[#allocation4 + $0x4] sm:$0xf]
    %v48 = vld [vmem:[#allocation4 + $0x8] sm:$0xf]
    %v49 = vld [vmem:[#allocation4 + $0xc] sm:$0xf]
    %v50 = vld [vmem:[%s2] sm:$0x1]
    %v52 = vlaneseq
    %v53 = vshrl.u32 %v52, 7
    %v54 = vsub.s32 0, %v53
    %v55 = vrot.slane %v50, %v54
    %v61 = vunpack.c.l.b16 %v46
    %v62 = vunpack.c.l.b16 %v47
    %v63 = vunpack.c.l.b16 %v48
    %v64 = vunpack.c.l.b16 %v49
    %v65 = vpack.c.b16 %v62, %v61
    %v66 = vpack.c.b16 %v64, %v63
    %vm69 = vcmask 261120
    %v71 = vsel %vm69, %v45, 0
    %73 = vmatprep.subr.bf16.mxu0 0
    %74 = vmatpush1.bf16.msra.mxu0 %v65
    %75 = vmatprep.subr.bf16.mxu0 0
    %76 = vmatpush1.bf16.msra.mxu0 %v66
    %77 = vmatprep.subr.bf16.mxu0 0
    %78 = vmatpush1.bf16.msra.mxu0 0
    %79 = vmatprep.subr.bf16.mxu0 0
    %80 = vmatpush1.bf16.msra.mxu0 0
    %81 = vmatprep.subr.bf16.mxu0 0
    %82 = vmatpush1.bf16.msra.mxu0 0
    %83 = vmatprep.subr.bf16.mxu0 0
    %84 = vmatpush1.bf16.msra.mxu0 0
    %85 = vmatprep.subr.bf16.mxu0 0
    %86 = vmatpush1.bf16.msra.mxu0 0
    %87 = vmatprep.subr.bf16.mxu0 0
    %88 = vmatpush1.bf16.msra.mxu0 0
    %89 = vmatprep.subr.bf16.mxu0 0
    %90 = vmatpush1.bf16.msra.mxu0 0
    %91 = vmatprep.subr.bf16.mxu0 0
    %92 = vmatpush1.bf16.msra.mxu0 0
    %93 = vmatprep.subr.bf16.mxu0 0
    %94 = vmatpush1.bf16.msra.mxu0 0
    %95 = vmatprep.subr.bf16.mxu0 0
    %96 = vmatpush1.bf16.msra.mxu0 0
    %97 = vmatprep.subr.bf16.mxu0 0
    %98 = vmatpush1.bf16.msra.mxu0 0
    %99 = vmatprep.subr.bf16.mxu0 0
    %100 = vmatpush1.bf16.msra.mxu0 0
    %101 = vmatprep.subr.bf16.mxu0 0
    %102 = vmatpush1.bf16.msra.mxu0 0
    %103 = vmatprep.subr.bf16.mxu0 0
    %104 = vmatpush1.bf16.msra.mxu0 0
    %105 = vmatprep.mubr.bf16.mxu0 0
    %106 = vmatmul.mubr.bf16.gmra.mrb[0].mxu0 %v71
    %v107 = vpop.f32.mrb[0].mxu0
    %v108 = vadd.f32 %v55, %v107
    %v109 = vpop.f32.mrb[0].mxu0
    %v110 = vpop.f32.mrb[0].mxu0
    %v111 = vadd.f32 %v55, %v110
    %v112 = vpop.f32.mrb[0].mxu0
    %113 = vdwg.mxu0
    %v114 = vpack.c.bf16 %v111, %v108
    %v116 = vunpack.c.l.b16 %v114
    %v117 = vunpack.c.h.b16 %v114
    %v118 = vpack.c.b16 %v116, %v116
    %v119 = vpack.c.b16 %v117, %v117
    %vm122 = vcmask 781312
    %123 = vst.msk [vmem:[%s3] sm:$0xf] %vm122, %v118
    %124 = vst.msk [vmem:[%s3 + $0x4] sm:$0xf] %vm122, %v119
    // Predicated region
    $region22: #{temporal_attention.3} parent=1 // pred_check
      _
    $region23: #{temporal_attention.3} parent=1 // pred_check_branch
      %126 = sbr.rel (0) target = $region25
    $region24: #{temporal_attention.3} parent=1 // pred_region
      _
    $region25: #{temporal_attention.3} parent=1 // pred_fallthru
      _
    // Predicated region
    $region26: #{temporal_attention.3} parent=1 // pred_check
      _
    $region27: #{temporal_attention.3} parent=1 // pred_check_branch
      %128 = sbr.rel (0) target = $region29
    $region28: #{temporal_attention.3} parent=1 // pred_region
      _
    $region29: #{temporal_attention.3} parent=1 // pred_fallthru
      _
    %129 = vsyncpa [#allocation3], 1
    %130 = vsyncpa [#allocation5], 1

// kernel: temporal_attention.4
$region0: #{temporal_attention.4}
  #allocation0 [shape = 'u32[]', space=smem, size = 0x4, offset = 0x4, fixed_abs, tag = 'smem constant byte address 0x4 - core index']
  #allocation1 [shape = 'u32[144,128]{1,0:T(1,128)}', space=vmem, size = 0x12000, scoped, tag = 'internal scratch']
  %s0 = inlined_call_operand.vmem [shape: bf16[8,8,8], index: 0, kind: input, shape index: {}]
  %s1 = inlined_call_operand.vmem [shape: bf16[8,8,8], index: 1, kind: input, shape index: {}]
  %s2 = inlined_call_operand.vmem [shape: bf16[8,8,8], index: 2, kind: input, shape index: {}]
  %s3 = inlined_call_operand.vmem [shape: bf16[8,8,8], index: 3, kind: output, shape index: {0}]
  %s4 = inlined_call_operand.hbm [shape: f32[8,8,8], index: 4, kind: output, shape index: {1}]
  %5 = xla_tuple %s3, %s4
  %s6 = sld [smem:[#allocation0]]
  $region53: #{temporal_attention.4} parent=0
    _
  %s8 = ssub.s32 1, %s6
  %s9 = scalar_select 0, %s8, %s6
  $region1: #{temporal_attention.4} parent=0
    #allocation2 [shape = 'u8[32768]{0}', space=vmem, size = 0x8000, scoped, tag = 'output window, operand 1']
    #allocation3 [shape = 's32[2]{0}', space=sflag, size = 0x8, scoped, tag = 'scoped memory for temporal_attention.4']
    %10 = vsyncpa [#allocation3], 0
    %s11 = scalar_lea.sflag [#allocation3], 1
    %12 = vsyncpa %s11, 0
    loop: start=0, step=1, limit=4
    $region2: #{temporal_attention.4} parent=1 // loop_pre_header
      _
    $region3: #{temporal_attention.4} parent=1 // loop_header
      %s14 = sphi 0, %s18
      %p15 = scmp.ge.s32.totalorder %s14, 4
      %s21 = sphi 0, %s33
      %s22 = sphi 0, %s29
      %s23 = sphi 0, %s21
      %s24 = sphi 0, %s22
      %s25 = sphi 0, %s23
      %s26 = sphi 0, %s24
      %s38 = sphi 0, %s40
      %s41 = sphi 0, %s38
      %s42 = sphi 0, %s41
      %s58 = sphi 0, %s42
      %s64 = sphi 0, %s66
      %s67 = sphi 0, %s64
      %s68 = sphi 0, %s67
      %s84 = sphi 0, %s68
      %s90 = sphi 0, %s92
      %s93 = sphi 0, %s90
      %s94 = sphi 0, %s93
      %s110 = sphi 0, %s94
      %s118 = sphi 0, %s120
      %s121 = sphi 0, %s118
      %s122 = sphi 0, %s121
      %s138 = sphi 0, %s122
      %s146 = sphi 0, %s148
      %s149 = sphi 0, %s146
      %s150 = sphi 0, %s149
      %s166 = sphi 0, %s150
    $region4: #{temporal_attention.4} parent=1 // loop_header_branch
      %17 = sbr.rel (%p15) target = $region8
    $region5: #{temporal_attention.4} parent=1 // loop_body
      %s19 = ssub.s32 %s14, 1
      %s20 = ssub.s32 %s14, 2
      %s27 = sadd.s32 1, %s22
      %p28 = scmp.ge.s32.totalorder %s27, 1
      %s29 = scalar_select %p28, 0, %s27
      %s30 = sadd.s32 1, %s21
      %s31 = scalar_select %p28, %s30, %s21
      %p32 = scmp.ge.s32.totalorder %s31, 2
      %s33 = scalar_select %p32, 0, %s31
      %s34 = ssub.s32 %s21, %s33
      %s35 = ssub.s32 %s22, %s29
      %s36 = sor.u32 %s34, %s35
      %p37 = scmp.eq.s32.totalorder %s36, 0
      %s39 = sadd.s32 %s38, 1
      %s40 = scalar_select %p37, %s38, %s39
      %p43 = pneg %p37
      %p44 = scmp.eq.s32.totalorder %s14, 1
      %p45 = por %p43, %p44
      %p46 = scmp.ne.s32.totalorder %s38, %s41
      %p47 = scmp.eq.s32.totalorder %s14, 0
      %p48 = por %p46, %p47
      %p49 = scmp.ne.s32.totalorder %s38, %s41
      %p50 = scmp.eq.s32.totalorder %s19, 1
      %p51 = por %p49, %p50
      %p52 = scmp.ne.s32.totalorder %s41, %s42
      %p53 = scmp.eq.s32.totalorder %s19, 0
      %p54 = por %p52, %p53
      %p55 = scmp.ne.s32.totalorder %s41, %s42
      %p56 = scmp.eq.s32.totalorder %s20, 1
      %p57 = por %p55, %p56
      %p59 = scmp.ne.s32.totalorder %s42, %s58
      %p60 = scmp.eq.s32.totalorder %s20, 0
      %p61 = por %p59, %p60
      %s62 = ssub.s32 %s21, %s33
      %p63 = scmp.eq.s32.totalorder %s62, 0
      %s65 = sadd.s32 %s64, 1
      %s66 = scalar_select %p63, %s64, %s65
      %p69 = pneg %p63
      %p70 = scmp.eq.s32.totalorder %s14, 1
      %p71 = por %p69, %p70
      %p72 = scmp.ne.s32.totalorder %s64, %s67
      %p73 = scmp.eq.s32.totalorder %s14, 0
      %p74 = por %p72, %p73
      %p75 = scmp.ne.s32.totalorder %s64, %s67
      %p76 = scmp.eq.s32.totalorder %s19, 1
      %p77 = por %p75, %p76
      %p78 = scmp.ne.s32.totalorder %s67, %s68
      %p79 = scmp.eq.s32.totalorder %s19, 0
      %p80 = por %p78, %p79
      %p81 = scmp.ne.s32.totalorder %s67, %s68
      %p82 = scmp.eq.s32.totalorder %s20, 1
      %p83 = por %p81, %p82
      %p85 = scmp.ne.s32.totalorder %s68, %s84
      %p86 = scmp.eq.s32.totalorder %s20, 0
      %p87 = por %p85, %p86
      %s88 = ssub.s32 %s21, %s33
      %p89 = scmp.eq.s32.totalorder %s88, 0
      %s91 = sadd.s32 %s90, 1
      %s92 = scalar_select %p89, %s90, %s91
      %p95 = pneg %p89
      %p96 = scmp.eq.s32.totalorder %s14, 1
      %p97 = por %p95, %p96
      %p98 = scmp.ne.s32.totalorder %s90, %s93
      %p99 = scmp.eq.s32.totalorder %s14, 0
      %p100 = por %p98, %p99
      %p101 = scmp.ne.s32.totalorder %s90, %s93
      %p102 = scmp.eq.s32.totalorder %s19, 1
      %p103 = por %p101, %p102
      %p104 = scmp.ne.s32.totalorder %s93, %s94
      %p105 = scmp.eq.s32.totalorder %s19, 0
      %p106 = por %p104, %p105
      %p107 = scmp.ne.s32.totalorder %s93, %s94
      %p108 = scmp.eq.s32.totalorder %s20, 1
      %p109 = por %p107, %p108
      %p111 = scmp.ne.s32.totalorder %s94, %s110
      %p112 = scmp.eq.s32.totalorder %s20, 0
      %p113 = por %p111, %p112
      %s114 = ssub.s32 %s21, %s33
      %s115 = ssub.s32 %s22, %s29
      %s116 = sor.u32 %s114, %s115
      %p117 = scmp.eq.s32.totalorder %s116, 0
      %s119 = sadd.s32 %s118, 1
      %s120 = scalar_select %p117, %s118, %s119
      %p123 = pneg %p117
      %p124 = scmp.eq.s32.totalorder %s14, 1
      %p125 = por %p123, %p124
      %p126 = scmp.ne.s32.totalorder %s118, %s121
      %p127 = scmp.eq.s32.totalorder %s14, 0
      %p128 = por %p126, %p127
      %p129 = scmp.ne.s32.totalorder %s118, %s121
      %p130 = scmp.eq.s32.totalorder %s19, 1
      %p131 = por %p129, %p130
      %p132 = scmp.ne.s32.totalorder %s121, %s122
      %p133 = scmp.eq.s32.totalorder %s19, 0
      %p134 = por %p132, %p133
      %p135 = scmp.ne.s32.totalorder %s121, %s122
      %p136 = scmp.eq.s32.totalorder %s20, 1
      %p137 = por %p135, %p136
      %p139 = scmp.ne.s32.totalorder %s122, %s138
      %p140 = scmp.eq.s32.totalorder %s20, 0
      %p141 = por %p139, %p140
      %s142 = ssub.s32 %s21, %s33
      %s143 = ssub.s32 %s22, %s29
      %s144 = sor.u32 %s142, %s143
      %p145 = scmp.eq.s32.totalorder %s144, 0
      %s147 = sadd.s32 %s146, 1
      %s148 = scalar_select %p145, %s146, %s147
      %p151 = pneg %p145
      %p152 = scmp.eq.s32.totalorder %s14, 1
      %p153 = por %p151, %p152
      %p154 = scmp.ne.s32.totalorder %s146, %s149
      %p155 = scmp.eq.s32.totalorder %s14, 0
      %p156 = por %p154, %p155
      %p157 = scmp.ne.s32.totalorder %s146, %s149
      %p158 = scmp.eq.s32.totalorder %s19, 1
      %p159 = por %p157, %p158
      %p160 = scmp.ne.s32.totalorder %s149, %s150
      %p161 = scmp.eq.s32.totalorder %s19, 0
      %p162 = por %p160, %p161
      %p163 = scmp.ne.s32.totalorder %s149, %s150
      %p164 = scmp.eq.s32.totalorder %s20, 1
      %p165 = por %p163, %p164
      %p167 = scmp.ne.s32.totalorder %s150, %s166
      %p168 = scmp.eq.s32.totalorder %s20, 0
      %p169 = por %p167, %p168
      %p170 = scmp.le.s32.totalorder 1, %s14
      %p171 = scmp.lt.s32.totalorder %s14, 3
      %p172 = pnand %p170, %p171
      %p173 = pneg %p172
      // Predicated region
      $region9: #{temporal_attention.4} parent=5 // pred_check
        _
      $region10: #{temporal_attention.4} parent=5 // pred_check_branch
        %175 = sbr.rel (%p172) target = $region12
      $region11: #{temporal_attention.4} parent=5 // pred_region
        %s176 = ssub.s32 %s14, 1
      $region12: #{temporal_attention.4} parent=5 // pred_fallthru
        _
      %p177 = scmp.lt.s32.totalorder %s14, 2
      // Predicated region
      $region13: #{temporal_attention.4} parent=5 // pred_check
        %p178 = pneg %p177
      $region14: #{temporal_attention.4} parent=5 // pred_check_branch
        %180 = sbr.rel (%p178) target = $region16
      $region15: #{temporal_attention.4} parent=5 // pred_region
        // Predicated region
        $region17: #{temporal_attention.4} parent=15 // pred_check
          %p181 = pneg %p48
        $region18: #{temporal_attention.4} parent=15 // pred_check_branch
          %183 = sbr.rel (%p181) target = $region20
        $region19: #{temporal_attention.4} parent=15 // pred_region
          %s184 = smul.u32 4, %s21
          %p185 = scmp.lt.s32.totalorder %s184, 7
          %s186 = scalar_select %p185, %s184, 7
          %p187 = scmp.lt.s32.totalorder %s22, 0
          %s188 = scalar_select %p187, %s22, 0
          %s189 = sadd.s32 %s188, %s186
          %s190 = smul.addr %s189, 4
          %s191 = scalar_lea.vmem %s0, %s190
          %s192 = smul.u32 4, %s21
        $region20: #{temporal_attention.4} parent=15 // pred_fallthru
          _
        // Predicated region
        $region21: #{temporal_attention.4} parent=15 // pred_check
          %p193 = pneg %p74
        $region22: #{temporal_attention.4} parent=15 // pred_check_branch
          %195 = sbr.rel (%p193) target = $region24
        $region23: #{temporal_attention.4} parent=15 // pred_region
          %s196 = smul.u32 4, %s21
          %p197 = scmp.lt.s32.totalorder %s196, 7
          %s198 = scalar_select %p197, %s196, 7
          %s199 = smul.addr %s198, 4
          %s200 = scalar_lea.vmem %s1, %s199
          %s201 = smul.u32 4, %s21
        $region24: #{temporal_attention.4} parent=15 // pred_fallthru
          _
        // Predicated region
        $region25: #{temporal_attention.4} parent=15 // pred_check
          %p202 = pneg %p100
        $region26: #{temporal_attention.4} parent=15 // pred_check_branch
          %204 = sbr.rel (%p202) target = $region28
        $region27: #{temporal_attention.4} parent=15 // pred_region
          %s205 = smul.u32 4, %s21
          %p206 = scmp.lt.s32.totalorder %s205, 7
          %s207 = scalar_select %p206, %s205, 7
          %s208 = smul.addr %s207, 4
          %s209 = scalar_lea.vmem %s2, %s208
          %s210 = smul.u32 4, %s21
        $region28: #{temporal_attention.4} parent=15 // pred_fallthru
          _
      $region16: #{temporal_attention.4} parent=5 // pred_fallthru
        _
      %p211 = scmp.le.s32.totalorder 1, %s14
      %p212 = scmp.lt.s32.totalorder %s14, 3
      %p213 = pnand %p211, %p212
      %p214 = pneg %p213
      // Predicated region
      $region29: #{temporal_attention.4} parent=5 // pred_check
        _
      $region30: #{temporal_attention.4} parent=5 // pred_check_branch
        %216 = sbr.rel (%p213) target = $region32
      $region31: #{temporal_attention.4} parent=5 // pred_region
        %s217 = ssub.s32 %s14, 1
        %s218 = smul.u32 4, %s23
        %p219 = scmp.lt.s32.totalorder %s218, 7
        %s220 = scalar_select %p219, %s218, 7
        %p221 = scmp.lt.s32.totalorder %s24, 0
        %s222 = scalar_select %p221, %s24, 0
        %s223 = sadd.s32 %s222, %s220
        %s224 = smul.addr %s223, 4
        %s225 = scalar_lea.vmem %s0, %s224
        %p226 = pneg %p54
        %p227 = pneg %p51
        %s228 = smul.u32 4, %s23
        %p229 = scmp.lt.s32.totalorder %s228, 7
        %s230 = scalar_select %p229, %s228, 7
        %s231 = smul.addr %s230, 4
        %s232 = scalar_lea.vmem %s1, %s231
        %p233 = pneg %p80
        %p234 = pneg %p77
        %s235 = smul.u32 4, %s23
        %p236 = scmp.lt.s32.totalorder %s235, 7
        %s237 = scalar_select %p236, %s235, 7
        %s238 = smul.addr %s237, 4
        %s239 = scalar_lea.vmem %s2, %s238
        %p240 = pneg %p106
        %p241 = pneg %p103
        %p242 = pneg %p134
        %p243 = pneg %p131
        %s244 = smul.u32 4, %s23
        %p245 = scmp.lt.s32.totalorder %s244, 7
        %s246 = scalar_select %p245, %s244, 7
        %p247 = scmp.lt.s32.totalorder %s24, 0
        %s248 = scalar_select %p247, %s24, 0
        %s249 = sadd.s32 %s248, %s246
        %s250 = smul.addr %s249, 4
        %s251 = scalar_lea.vmem %s3, %s250
        %p252 = pneg %p162
        %p253 = pneg %p159
        %s254 = sand.u32 %s149, 1
        %s255 = scalar_lea.sflag [#allocation3], %s254
        %s256 = sand.u32 %s149, 1
        %s257 = smul.addr %s256, 32
        %s258 = scalar_lea.vmem [#allocation2], %s257
        %s259 = smul.u32 4, %s23
        %p260 = scmp.lt.s32.totalorder %s259, 7
        %s261 = scalar_select %p260, %s259, 7
        %p262 = scmp.lt.s32.totalorder %s24, 0
        %s263 = scalar_select %p262, %s24, 0
        %s264 = sadd.s32 %s263, %s261
        %s265 = smul.addr %s264, 4
        %s266 = scalar_lea.vmem %s0, %s265
        %s267 = smul.u32 4, %s23
        %s268 = smul.u32 4, %s23
        %p269 = scmp.lt.s32.totalorder %s268, 7
        %s270 = scalar_select %p269, %s268, 7
        %s271 = smul.addr %s270, 4
        %s272 = scalar_lea.vmem %s1, %s271
        %s273 = smul.u32 4, %s23
        %s274 = smul.u32 4, %s23
        %p275 = scmp.lt.s32.totalorder %s274, 7
        %s276 = scalar_select %p275, %s274, 7
        %s277 = smul.addr %s276, 4
        %s278 = scalar_lea.vmem %s2, %s277
        %s279 = smul.u32 4, %s23
        %s280 = smul.u32 4, %s23
        %p281 = scmp.lt.s32.totalorder %s280, 7
        %s282 = scalar_select %p281, %s280, 7
        %p283 = scmp.lt.s32.totalorder %s24, 0
        %s284 = scalar_select %p283, %s24, 0
        %s285 = sadd.s32 %s284, %s282
        %s286 = smul.addr %s285, 4
        %s287 = scalar_lea.vmem %s3, %s286
        %s288 = smul.u32 4, %s23
        %s289 = smul.u32 4, %s23
        %v291 = vld [vmem:[%s266] sm:$0xf]
        %v292 = vld [vmem:[%s266 + $0x4] sm:$0xf]
        %v293 = vld [vmem:[%s266 + $0x8] sm:$0xf]
        %v294 = vld [vmem:[%s266 + $0xc] sm:$0xf]
        %v295 = vld [vmem:[%s272] sm:$0xf]
        %v296 = vld [vmem:[%s272 + $0x4] sm:$0xf]
        %v297 = vld [vmem:[%s272 + $0x8] sm:$0xf]
        %v298 = vld [vmem:[%s272 + $0xc] sm:$0xf]
        %v299 = vld [vmem:[%s278] sm:$0xf]
        %v300 = vld [vmem:[%s278 + $0x4] sm:$0xf]
        %v301 = vld [vmem:[%s278 + $0x8] sm:$0xf]
        %v302 = vld [vmem:[%s278 + $0xc] sm:$0xf]
        %vm303 = vcmask 64512
        %v305 = vsel %vm303, %v291, 0
        %v308 = vsel %vm303, %v295, 0
        %310 = vmatprep.subr.bf16.mxu0 0
        %311 = vmatpush1.bf16.xpose.msra.mxu0 %v308
        %312 = vmatprep.subr.bf16.mxu0 0
        %313 = vmatpush1.bf16.xpose.msra.mxu0 0
        %314 = vmatprep.subr.bf16.mxu0 0
        %315 = vmatpush1.bf16.xpose.msra.mxu0 0
        %316 = vmatprep.subr.bf16.mxu0 0
        %317 = vmatpush1.bf16.xpose.msra.mxu0 0
        %318 = vmatprep.subr.bf16.mxu0 0
        %319 = vmatpush1.bf16.xpose.msra.mxu0 0
        %320 = vmatprep.subr.bf16.mxu0 0
        %321 = vmatpush1.bf16.xpose.msra.mxu0 0
        %322 = vmatprep.subr.bf16.mxu0 0
        %323 = vmatpush1.bf16.xpose.msra.mxu0 0
        %324 = vmatprep.subr.bf16.mxu0 0
        %325 = vmatpush1.bf16.xpose.msra.mxu0 0
        %326 = vmatprep.subr.bf16.mxu0 0
        %327 = vmatpush1.bf16.xpose.msra.mxu0 0
        %328 = vmatprep.subr.bf16.mxu0 0
        %329 = vmatpush1.bf16.xpose.msra.mxu0 0
        %330 = vmatprep.subr.bf16.mxu0 0
        %331 = vmatpush1.bf16.xpose.msra.mxu0 0
        %332 = vmatprep.subr.bf16.mxu0 0
        %333 = vmatpush1.bf16.xpose.msra.mxu0 0
        %334 = vmatprep.subr.bf16.mxu0 0
        %335 = vmatpush1.bf16.xpose.msra.mxu0 0
        %336 = vmatprep.subr.bf16.mxu0 0
        %337 = vmatpush1.bf16.xpose.msra.mxu0 0
        %338 = vmatprep.subr.bf16.mxu0 0
        %339 = vmatpush1.bf16.xpose.msra.mxu0 0
        %340 = vmatprep.subr.bf16.mxu0 0
        %341 = vmatpush1.bf16.xpose.msra.mxu0 0
        %342 = vmatprep.mubr.bf16.mxu0 0
        %343 = vmatmul.mubr.bf16.gmra.mrb[0].mxu0 %v305
        %v344 = vpop.f32.mrb[0].mxu0
        %v345 = vadd.f32 0.0, %v344
        %v346 = vpop.f32.mrb[0].mxu0
        %v347 = vpop.f32.mrb[0].mxu0
        %v348 = vpop.f32.mrb[0].mxu0
        %349 = vdwg.mxu0
        %v351 = vsel %vm303, %v292, 0
        %v354 = vsel %vm303, %v296, 0
        %356 = vmatprep.subr.bf16.mxu0 0
        %357 = vmatpush1.bf16.xpose.msra.mxu0 %v354
        %358 = vmatprep.subr.bf16.mxu0 0
        %359 = vmatpush1.bf16.xpose.msra.mxu0 0
        %360 = vmatprep.subr.bf16.mxu0 0
        %361 = vmatpush1.bf16.xpose.msra.mxu0 0
        %362 = vmatprep.subr.bf16.mxu0 0
        %363 = vmatpush1.bf16.xpose.msra.mxu0 0
        %364 = vmatprep.subr.bf16.mxu0 0
        %365 = vmatpush1.bf16.xpose.msra.mxu0 0
        %366 = vmatprep.subr.bf16.mxu0 0
        %367 = vmatpush1.bf16.xpose.msra.mxu0 0
        %368 = vmatprep.subr.bf16.mxu0 0
        %369 = vmatpush1.bf16.xpose.msra.mxu0 0
        %370 = vmatprep.subr.bf16.mxu0 0
        %371 = vmatpush1.bf16.xpose.msra.mxu0 0
        %372 = vmatprep.subr.bf16.mxu0 0
        %373 = vmatpush1.bf16.xpose.msra.mxu0 0
        %374 = vmatprep.subr.bf16.mxu0 0
        %375 = vmatpush1.bf16.xpose.msra.mxu0 0
        %376 = vmatprep.subr.bf16.mxu0 0
        %377 = vmatpush1.bf16.xpose.msra.mxu0 0
        %378 = vmatprep.subr.bf16.mxu0 0
        %379 = vmatpush1.bf16.xpose.msra.mxu0 0
        %380 = vmatprep.subr.bf16.mxu0 0
        %381 = vmatpush1.bf16.xpose.msra.mxu0 0
        %382 = vmatprep.subr.bf16.mxu0 0
        %383 = vmatpush1.bf16.xpose.msra.mxu0 0
        %384 = vmatprep.subr.bf16.mxu0 0
        %385 = vmatpush1.bf16.xpose.msra.mxu0 0
        %386 = vmatprep.subr.bf16.mxu0 0
        %387 = vmatpush1.bf16.xpose.msra.mxu0 0
        %388 = vmatprep.mubr.bf16.mxu0 0
        %389 = vmatmul.mubr.bf16.gmra.mrb[0].mxu0 %v351
        %v390 = vpop.f32.mrb[0].mxu0
        %v391 = vadd.f32 0.0, %v390
        %v392 = vpop.f32.mrb[0].mxu0
        %v393 = vpop.f32.mrb[0].mxu0
        %v394 = vpop.f32.mrb[0].mxu0
        %395 = vdwg.mxu0
        %v397 = vsel %vm303, %v293, 0
        %v400 = vsel %vm303, %v297, 0
        %402 = vmatprep.subr.bf16.mxu0 0
        %403 = vmatpush1.bf16.xpose.msra.mxu0 %v400
        %404 = vmatprep.subr.bf16.mxu0 0
        %405 = vmatpush1.bf16.xpose.msra.mxu0 0
        %406 = vmatprep.subr.bf16.mxu0 0
        %407 = vmatpush1.bf16.xpose.msra.mxu0 0
        %408 = vmatprep.subr.bf16.mxu0 0
        %409 = vmatpush1.bf16.xpose.msra.mxu0 0
        %410 = vmatprep.subr.bf16.mxu0 0
        %411 = vmatpush1.bf16.xpose.msra.mxu0 0
        %412 = vmatprep.subr.bf16.mxu0 0
        %413 = vmatpush1.bf16.xpose.msra.mxu0 0
        %414 = vmatprep.subr.bf16.mxu0 0
        %415 = vmatpush1.bf16.xpose.msra.mxu0 0
        %416 = vmatprep.subr.bf16.mxu0 0
        %417 = vmatpush1.bf16.xpose.msra.mxu0 0
        %418 = vmatprep.subr.bf16.mxu0 0
        %419 = vmatpush1.bf16.xpose.msra.mxu0 0
        %420 = vmatprep.subr.bf16.mxu0 0
        %421 = vmatpush1.bf16.xpose.msra.mxu0 0
        %422 = vmatprep.subr.bf16.mxu0 0
        %423 = vmatpush1.bf16.xpose.msra.mxu0 0
        %424 = vmatprep.subr.bf16.mxu0 0
        %425 = vmatpush1.bf16.xpose.msra.mxu0 0
        %426 = vmatprep.subr.bf16.mxu0 0
        %427 = vmatpush1.bf16.xpose.msra.mxu0 0
        %428 = vmatprep.subr.bf16.mxu0 0
        %429 = vmatpush1.bf16.xpose.msra.mxu0 0
        %430 = vmatprep.subr.bf16.mxu0 0
        %431 = vmatpush1.bf16.xpose.msra.mxu0 0
        %432 = vmatprep.subr.bf16.mxu0 0
        %433 = vmatpush1.bf16.xpose.msra.mxu0 0
        %434 = vmatprep.mubr.bf16.mxu0 0
        %435 = vmatmul.mubr.bf16.gmra.mrb[0].mxu0 %v397
        %v436 = vpop.f32.mrb[0].mxu0
        %v437 = vadd.f32 0.0, %v436
        %v438 = vpop.f32.mrb[0].mxu0
        %v439 = vpop.f32.mrb[0].mxu0
        %v440 = vpop.f32.mrb[0].mxu0
        %441 = vdwg.mxu0
        %v443 = vsel %vm303, %v294, 0
        %v446 = vsel %vm303, %v298, 0
        %448 = vmatprep.subr.bf16.mxu0 0
        %449 = vmatpush1.bf16.xpose.msra.mxu0 %v446
        %450 = vmatprep.subr.bf16.mxu0 0
        %451 = vmatpush1.bf16.xpose.msra.mxu0 0
        %452 = vmatprep.subr.bf16.mxu0 0
        %453 = vmatpush1.bf16.xpose.msra.mxu0 0
        %454 = vmatprep.subr.bf16.mxu0 0
        %455 = vmatpush1.bf16.xpose.msra.mxu0 0
        %456 = vmatprep.subr.bf16.mxu0 0
        %457 = vmatpush1.bf16.xpose.msra.mxu0 0
        %458 = vmatprep.subr.bf16.mxu0 0
        %459 = vmatpush1.bf16.xpose.msra.mxu0 0
        %460 = vmatprep.subr.bf16.mxu0 0
        %461 = vmatpush1.bf16.xpose.msra.mxu0 0
        %462 = vmatprep.subr.bf16.mxu0 0
        %463 = vmatpush1.bf16.xpose.msra.mxu0 0
        %464 = vmatprep.subr.bf16.mxu0 0
        %465 = vmatpush1.bf16.xpose.msra.mxu0 0
        %466 = vmatprep.subr.bf16.mxu0 0
        %467 = vmatpush1.bf16.xpose.msra.mxu0 0
        %468 = vmatprep.subr.bf16.mxu0 0
        %469 = vmatpush1.bf16.xpose.msra.mxu0 0
        %470 = vmatprep.subr.bf16.mxu0 0
        %471 = vmatpush1.bf16.xpose.msra.mxu0 0
        %472 = vmatprep.subr.bf16.mxu0 0
        %473 = vmatpush1.bf16.xpose.msra.mxu0 0
        %474 = vmatprep.subr.bf16.mxu0 0
        %475 = vmatpush1.bf16.xpose.msra.mxu0 0
        %476 = vmatprep.subr.bf16.mxu0 0
        %477 = vmatpush1.bf16.xpose.msra.mxu0 0
        %478 = vmatprep.subr.bf16.mxu0 0
        %479 = vmatpush1.bf16.xpose.msra.mxu0 0
        %480 = vmatprep.mubr.bf16.mxu0 0
        %481 = vmatmul.mubr.bf16.gmra.mrb[0].mxu0 %v443
        %v482 = vpop.f32.mrb[0].mxu0
        %v483 = vadd.f32 0.0, %v482
        %v484 = vpop.f32.mrb[0].mxu0
        %v485 = vpop.f32.mrb[0].mxu0
        %v486 = vpop.f32.mrb[0].mxu0
        %487 = vdwg.mxu0
        %v488 = vsel %vm303, %v345, -inf
        %489 = vmax.xlane.f32.xlu0 %v488
        %v490 = vpop.xlane.xlu0 %489
        %v491 = vsel %vm303, %v391, -inf
        %492 = vmax.xlane.f32.xlu0 %v491
        %v493 = vpop.xlane.xlu0 %492
        %v494 = vsel %vm303, %v437, -inf
        %495 = vmax.xlane.f32.xlu0 %v494
        %v496 = vpop.xlane.xlu0 %495
        %v497 = vsel %vm303, %v483, -inf
        %498 = vmax.xlane.f32.xlu0 %v497
        %v499 = vpop.xlane.xlu0 %498
        %v500 = vsub.f32 %v345, %v490
        %v501 = vsub.f32 %v391, %v493
        %v502 = vsub.f32 %v437, %v496
        %v503 = vsub.f32 %v483, %v499
        %v504 = vmul.f32 %v500, 1.442695
        %v505 = vpow.pop %v504
        %v506 = vmul.f32 %v501, 1.442695
        %v507 = vpow.pop %v506
        %v508 = vmul.f32 %v502, 1.442695
        %v509 = vpow.pop %v508
        %v510 = vmul.f32 %v503, 1.442695
        %v511 = vpow.pop %v510
        %v512 = vsel %vm303, %v505, 0.0
        %513 = vadd.xlane.f32.xlu0 %v512
        %v514 = vpop.xlane.xlu0 %513
        %v515 = vsel %vm303, %v507, 0.0
        %516 = vadd.xlane.f32.xlu0 %v515
        %v517 = vpop.xlane.xlu0 %516
        %v518 = vsel %vm303, %v509, 0.0
        %519 = vadd.xlane.f32.xlu0 %v518
        %v520 = vpop.xlane.xlu0 %519
        %v521 = vsel %vm303, %v511, 0.0
        %522 = vadd.xlane.f32.xlu0 %v521
        %v523 = vpop.xlane.xlu0 %522
        %v524 = vrcp.pop %v514
        %v525 = vrcp.pop %v517
        %v526 = vrcp.pop %v520
        %v527 = vrcp.pop %v523
        %v528 = vmul.f32 %v505, %v524
        %v529 = vmul.f32 %v507, %v525
        %v530 = vmul.f32 %v509, %v526
        %v531 = vmul.f32 %v511, %v527
        %532 = vst.msk [vmem:[%s258] sm:$0xff] %vm303, %v528
        %533 = vst.msk [vmem:[%s258 + $0x8] sm:$0xff] %vm303, %v529
        %534 = vst.msk [vmem:[%s258 + $0x10] sm:$0xff] %vm303, %v530
        %535 = vst.msk [vmem:[%s258 + $0x18] sm:$0xff] %vm303, %v531
        %v536 = vpack.c.bf16 %v528, %v528
        %v537 = vpack.c.bf16 %v529, %v529
        %v538 = vpack.c.bf16 %v530, %v530
        %v539 = vpack.c.bf16 %v531, %v531
        %v541 = vsel %vm303, %v536, 0
        %vm543 = vcmask 1043456
        %v545 = vsel %vm543, %v299, 0
        %547 = vmatprep.subr.bf16.mxu0 0
        %548 = vmatpush1.bf16.msra.mxu0 %v545
        %549 = vmatprep.subr.bf16.mxu0 0
        %550 = vmatpush1.bf16.msra.mxu0 0
        %551 = vmatprep.subr.bf16.mxu0 0
        %552 = vmatpush1.bf16.msra.mxu0 0
        %553 = vmatprep.subr.bf16.mxu0 0
        %554 = vmatpush1.bf16.msra.mxu0 0
        %555 = vmatprep.subr.bf16.mxu0 0
        %556 = vmatpush1.bf16.msra.mxu0 0
        %557 = vmatprep.subr.bf16.mxu0 0
        %558 = vmatpush1.bf16.msra.mxu0 0
        %559 = vmatprep.subr.bf16.mxu0 0
        %560 = vmatpush1.bf16.msra.mxu0 0
        %561 = vmatprep.subr.bf16.mxu0 0
        %562 = vmatpush1.bf16.msra.mxu0 0
        %563 = vmatprep.subr.bf16.mxu0 0
        %564 = vmatpush1.bf16.msra.mxu0 0
        %565 = vmatprep.subr.bf16.mxu0 0
        %566 = vmatpush1.bf16.msra.mxu0 0
        %567 = vmatprep.subr.bf16.mxu0 0
        %568 = vmatpush1.bf16.msra.mxu0 0
        %569 = vmatprep.subr.bf16.mxu0 0
        %570 = vmatpush1.bf16.msra.mxu0 0
        %571 = vmatprep.subr.bf16.mxu0 0
        %572 = vmatpush1.bf16.msra.mxu0 0
        %573 = vmatprep.subr.bf16.mxu0 0
        %574 = vmatpush1.bf16.msra.mxu0 0
        %575 = vmatprep.subr.bf16.mxu0 0
        %576 = vmatpush1.bf16.msra.mxu0 0
        %577 = vmatprep.subr.bf16.mxu0 0
        %578 = vmatpush1.bf16.msra.mxu0 0
        %579 = vmatprep.mubr.bf16.mxu0 0
        %580 = vmatmul.mubr.bf16.gmra.mrb[0].mxu0 %v541
        %v581 = vpop.f32.mrb[0].mxu0
        %v582 = vadd.f32 0.0, %v581
        %v583 = vpop.f32.mrb[0].mxu0
        %v584 = vpop.f32.mrb[0].mxu0
        %v585 = vpop.f32.mrb[0].mxu0
        %586 = vdwg.mxu0
        %v588 = vsel %vm303, %v537, 0
        %v591 = vsel %vm543, %v300, 0
        %593 = vmatprep.subr.bf16.mxu0 0
        %594 = vmatpush1.bf16.msra.mxu0 %v591
        %595 = vmatprep.subr.bf16.mxu0 0
        %596 = vmatpush1.bf16.msra.mxu0 0
        %597 = vmatprep.subr.bf16.mxu0 0
        %598 = vmatpush1.bf16.msra.mxu0 0
        %599 = vmatprep.subr.bf16.mxu0 0
        %600 = vmatpush1.bf16.msra.mxu0 0
        %601 = vmatprep.subr.bf16.mxu0 0
        %602 = vmatpush1.bf16.msra.mxu0 0
        %603 = vmatprep.subr.bf16.mxu0 0
        %604 = vmatpush1.bf16.msra.mxu0 0
        %605 = vmatprep.subr.bf16.mxu0 0
        %606 = vmatpush1.bf16.msra.mxu0 0
        %607 = vmatprep.subr.bf16.mxu0 0
        %608 = vmatpush1.bf16.msra.mxu0 0
        %609 = vmatprep.subr.bf16.mxu0 0
        %610 = vmatpush1.bf16.msra.mxu0 0
        %611 = vmatprep.subr.bf16.mxu0 0
        %612 = vmatpush1.bf16.msra.mxu0 0
        %613 = vmatprep.subr.bf16.mxu0 0
        %614 = vmatpush1.bf16.msra.mxu0 0
        %615 = vmatprep.subr.bf16.mxu0 0
        %616 = vmatpush1.bf16.msra.mxu0 0
        %617 = vmatprep.subr.bf16.mxu0 0
        %618 = vmatpush1.bf16.msra.mxu0 0
        %619 = vmatprep.subr.bf16.mxu0 0
        %620 = vmatpush1.bf16.msra.mxu0 0
        %621 = vmatprep.subr.bf16.mxu0 0
        %622 = vmatpush1.bf16.msra.mxu0 0
        %623 = vmatprep.subr.bf16.mxu0 0
        %624 = vmatpush1.bf16.msra.mxu0 0
        %625 = vmatprep.mubr.bf16.mxu0 0
        %626 = vmatmul.mubr.bf16.gmra.mrb[0].mxu0 %v588
        %v627 = vpop.f32.mrb[0].mxu0
        %v628 = vadd.f32 0.0, %v627
        %v629 = vpop.f32.mrb[0].mxu0
        %v630 = vpop.f32.mrb[0].mxu0
        %v631 = vpop.f32.mrb[0].mxu0
        %632 = vdwg.mxu0
        %v634 = vsel %vm303, %v538, 0
        %v637 = vsel %vm543, %v301, 0
        %639 = vmatprep.subr.bf16.mxu0 0
        %640 = vmatpush1.bf16.msra.mxu0 %v637
        %641 = vmatprep.subr.bf16.mxu0 0
        %642 = vmatpush1.bf16.msra.mxu0 0
        %643 = vmatprep.subr.bf16.mxu0 0
        %644 = vmatpush1.bf16.msra.mxu0 0
        %645 = vmatprep.subr.bf16.mxu0 0
        %646 = vmatpush1.bf16.msra.mxu0 0
        %647 = vmatprep.subr.bf16.mxu0 0
        %648 = vmatpush1.bf16.msra.mxu0 0
        %649 = vmatprep.subr.bf16.mxu0 0
        %650 = vmatpush1.bf16.msra.mxu0 0
        %651 = vmatprep.subr.bf16.mxu0 0
        %652 = vmatpush1.bf16.msra.mxu0 0
        %653 = vmatprep.subr.bf16.mxu0 0
        %654 = vmatpush1.bf16.msra.mxu0 0
        %655 = vmatprep.subr.bf16.mxu0 0
        %656 = vmatpush1.bf16.msra.mxu0 0
        %657 = vmatprep.subr.bf16.mxu0 0
        %658 = vmatpush1.bf16.msra.mxu0 0
        %659 = vmatprep.subr.bf16.mxu0 0
        %660 = vmatpush1.bf16.msra.mxu0 0
        %661 = vmatprep.subr.bf16.mxu0 0
        %662 = vmatpush1.bf16.msra.mxu0 0
        %663 = vmatprep.subr.bf16.mxu0 0
        %664 = vmatpush1.bf16.msra.mxu0 0
        %665 = vmatprep.subr.bf16.mxu0 0
        %666 = vmatpush1.bf16.msra.mxu0 0
        %667 = vmatprep.subr.bf16.mxu0 0
        %668 = vmatpush1.bf16.msra.mxu0 0
        %669 = vmatprep.subr.bf16.mxu0 0
        %670 = vmatpush1.bf16.msra.mxu0 0
        %671 = vmatprep.mubr.bf16.mxu0 0
        %672 = vmatmul.mubr.bf16.gmra.mrb[0].mxu0 %v634
        %v673 = vpop.f32.mrb[0].mxu0
        %v674 = vadd.f32 0.0, %v673
        %v675 = vpop.f32.mrb[0].mxu0
        %v676 = vpop.f32.mrb[0].mxu0
        %v677 = vpop.f32.mrb[0].mxu0
        %678 = vdwg.mxu0
        %v680 = vsel %vm303, %v539, 0
        %v683 = vsel %vm543, %v302, 0
        %685 = vmatprep.subr.bf16.mxu0 0
        %686 = vmatpush1.bf16.msra.mxu0 %v683
        %687 = vmatprep.subr.bf16.mxu0 0
        %688 = vmatpush1.bf16.msra.mxu0 0
        %689 = vmatprep.subr.bf16.mxu0 0
        %690 = vmatpush1.bf16.msra.mxu0 0
        %691 = vmatprep.subr.bf16.mxu0 0
        %692 = vmatpush1.bf16.msra.mxu0 0
        %693 = vmatprep.subr.bf16.mxu0 0
        %694 = vmatpush1.bf16.msra.mxu0 0
        %695 = vmatprep.subr.bf16.mxu0 0
        %696 = vmatpush1.bf16.msra.mxu0 0
        %697 = vmatprep.subr.bf16.mxu0 0
        %698 = vmatpush1.bf16.msra.mxu0 0
        %699 = vmatprep.subr.bf16.mxu0 0
        %700 = vmatpush1.bf16.msra.mxu0 0
        %701 = vmatprep.subr.bf16.mxu0 0
        %702 = vmatpush1.bf16.msra.mxu0 0
        %703 = vmatprep.subr.bf16.mxu0 0
        %704 = vmatpush1.bf16.msra.mxu0 0
        %705 = vmatprep.subr.bf16.mxu0 0
        %706 = vmatpush1.bf16.msra.mxu0 0
        %707 = vmatprep.subr.bf16.mxu0 0
        %708 = vmatpush1.bf16.msra.mxu0 0
        %709 = vmatprep.subr.bf16.mxu0 0
        %710 = vmatpush1.bf16.msra.mxu0 0
        %711 = vmatprep.subr.bf16.mxu0 0
        %712 = vmatpush1.bf16.msra.mxu0 0
        %713 = vmatprep.subr.bf16.mxu0 0
        %714 = vmatpush1.bf16.msra.mxu0 0
        %715 = vmatprep.subr.bf16.mxu0 0
        %716 = vmatpush1.bf16.msra.mxu0 0
        %717 = vmatprep.mubr.bf16.mxu0 0
        %718 = vmatmul.mubr.bf16.gmra.mrb[0].mxu0 %v680
        %v719 = vpop.f32.mrb[0].mxu0
        %v720 = vadd.f32 0.0, %v719
        %v721 = vpop.f32.mrb[0].mxu0
        %v722 = vpop.f32.mrb[0].mxu0
        %v723 = vpop.f32.mrb[0].mxu0
        %724 = vdwg.mxu0
        %v725 = vpack.c.bf16 %v582, %v582
        %v726 = vpack.c.bf16 %v628, %v628
        %v727 = vpack.c.bf16 %v674, %v674
        %v728 = vpack.c.bf16 %v720, %v720
        %vm729 = vcmask 60416
        %730 = vst.msk [vmem:[%s287] sm:$0xf] %vm729, %v725
        %731 = vst.msk [vmem:[%s287 + $0x4] sm:$0xf] %vm729, %v726
        %732 = vst.msk [vmem:[%s287 + $0x8] sm:$0xf] %vm729, %v727
        %733 = vst.msk [vmem:[%s287 + $0xc] sm:$0xf] %vm729, %v728
        %s734 = smul.u32 4, %s23
        %p735 = scmp.lt.s32.totalorder %s734, 7
        %s736 = scalar_select %p735, %s734, 7
        %p737 = scmp.lt.s32.totalorder %s24, 0
        %s738 = scalar_select %p737, %s24, 0
        %s739 = sadd.s32 %s738, %s736
        %s740 = smul.addr %s739, 4
        %s741 = scalar_lea.vmem %s3, %s740
        %s742 = sand.u32 %s149, 1
        %s743 = scalar_lea.sflag [#allocation3], %s742
        %s744 = sand.u32 %s149, 1
        %s745 = smul.addr %s744, 32
        %s746 = scalar_lea.vmem [#allocation2], %s745
        // Predicated region
        $region33: #{temporal_attention.4} parent=31 // pred_check
          %p747 = pneg %p131
        $region34: #{temporal_attention.4} parent=31 // pred_check_branch
          %749 = sbr.rel (%p747) target = $region36
        $region35: #{temporal_attention.4} parent=31 // pred_region
          %s750 = smul.u32 4, %s23
        $region36: #{temporal_attention.4} parent=31 // pred_fallthru
          _
        // Predicated region
        $region37: #{temporal_attention.4} parent=31 // pred_check
          %p751 = pneg %p159
        $region38: #{temporal_attention.4} parent=31 // pred_check_branch
          %753 = sbr.rel (%p751) target = $region40
        $region39: #{temporal_attention.4} parent=31 // pred_region
          %s754 = smul.u32 4, %s23
          %s756 = ssub.s32 512, 512
          %757 = vsyncadd %s743, %s756
          %s758 = sadd.s32 %s24, %s754
          %s759 = smul.addr %s758, 128
          %s760 = scalar_lea.hbm %s4, %s759
          %s761 = sshll.u32 %s746, 4
          %s762 = int_to_ptr.vmem [resolvable:$true] %s761
          %767 = dma.vmem_to_hbm [thread:$0]  %s762, 512, %s760, %s743, 128, 128, 8
        $region40: #{temporal_attention.4} parent=31 // pred_fallthru
          _
      $region32: #{temporal_attention.4} parent=5 // pred_fallthru
        _
      %p768 = scmp.le.s32.totalorder 2, %s14
      // Predicated region
      $region41: #{temporal_attention.4} parent=5 // pred_check
        %p769 = pneg %p768
      $region42: #{temporal_attention.4} parent=5 // pred_check_branch
        %771 = sbr.rel (%p769) target = $region44
      $region43: #{temporal_attention.4} parent=5 // pred_region
        %s772 = ssub.s32 %s14, 2
        // Predicated region
        $region45: #{temporal_attention.4} parent=43 // pred_check
          %p773 = pneg %p137
        $region46: #{temporal_attention.4} parent=43 // pred_check_branch
          %775 = sbr.rel (%p773) target = $region48
        $region47: #{temporal_attention.4} parent=43 // pred_region
          %s776 = smul.u32 4, %s25
          %p777 = scmp.lt.s32.totalorder %s776, 7
          %s778 = scalar_select %p777, %s776, 7
          %p779 = scmp.lt.s32.totalorder %s26, 0
          %s780 = scalar_select %p779, %s26, 0
          %s781 = sadd.s32 %s780, %s778
          %s782 = smul.addr %s781, 4
          %s783 = scalar_lea.vmem %s3, %s782
        $region48: #{temporal_attention.4} parent=43 // pred_fallthru
          _
        // Predicated region
        $region49: #{temporal_attention.4} parent=43 // pred_check
          %p784 = pneg %p165
        $region50: #{temporal_attention.4} parent=43 // pred_check_branch
          %786 = sbr.rel (%p784) target = $region52
        $region51: #{temporal_attention.4} parent=43 // pred_region
          %s787 = sand.u32 %s150, 1
          %s788 = scalar_lea.sflag [#allocation3], %s787
          %s789 = sand.u32 %s150, 1
          %s790 = smul.addr %s789, 32
          %s791 = scalar_lea.vmem [#allocation2], %s790
          %792 = dma.done %s788, 512
        $region52: #{temporal_attention.4} parent=43 // pred_fallthru
          _
      $region44: #{temporal_attention.4} parent=5 // pred_fallthru
        _
    $region6: #{temporal_attention.4} parent=1 // loop_footer
      %s18 = sadd.s32 1, %s14
    $region7: #{temporal_attention.4} parent=1 // loop_footer_branch
      %13 = sbr.rel target = $region3
    $region8: #{temporal_attention.4} parent=1 // loop_exit
      _
    %793 = vsyncpa [#allocation3], 1
    %s794 = scalar_lea.sflag [#allocation3], 1
    %795 = vsyncpa %s794, 1

</llo_original>
